<compile_context>
chip_gen: v6e
topology: v6e:2x2x1
jax: 0.10.0
libtpu: 0.0.40
codegen_flags: <defaults>
</compile_context>

<pallas_src>
import functools
import math

import numpy as np

import jax
import jax.numpy as jnp
from jax.experimental import pallas as pl
from jax.experimental.pallas import tpu as pltpu


# --------------------------------------------------------------------------- #
# helpers
# --------------------------------------------------------------------------- #
def _round_up(a: int, m: int) -> int:
    return ((a + m - 1) // m) * m


def _largest_aligned_divisor(total: int, cap: int, align: int = 128) -> int:
    """Largest multiple of `align` that divides `total` and is <= cap (floor: align)."""
    best = align
    t = align
    while t <= min(total, cap):
        if total % t == 0:
            best = t
        t += align
    return best


def _vmem_capacity_bytes() -> int:
    try:
        return int(pltpu.get_tpu_info().vmem_capacity_bytes)
    except Exception:
        return 64 * 1024 * 1024  # v7x-conservative fallback


def _inverse_map(degree: float, H: int, W: int):
    """Per output pixel: flat nearest-neighbour source index + validity mask.

    Counterclockwise for positive degree (matching the PyTorch module), rotation
    about the image center ((W-1)/2, (H-1)/2); out-of-bounds -> invalid (zero fill).
    """
    theta = math.radians(float(degree))
    c, s = math.cos(theta), math.sin(theta)
    cy, cx = (H - 1) / 2.0, (W - 1) / 2.0
    ys, xs = np.meshgrid(np.arange(H, dtype=np.float64),
                         np.arange(W, dtype=np.float64), indexing="ij")
    sx = c * (xs - cx) - s * (ys - cy) + cx
    sy = s * (xs - cx) + c * (ys - cy) + cy
    sxr = np.rint(sx).astype(np.int64)
    syr = np.rint(sy).astype(np.int64)
    valid = (sxr >= 0) & (sxr < W) & (syr >= 0) & (syr < H)
    src = np.clip(syr, 0, H - 1) * W + np.clip(sxr, 0, W - 1)
    return src.reshape(-1), valid.reshape(-1)


@functools.lru_cache(maxsize=64)
def _rotation_tables(degree: float, H: int, W: int, HWp: int, tk: int, tn: int,
                     dtype_name: str):
    """Compacted block-sparse one-hot selection tables (memoized, built in numpy).

    Returns:
      st_blocks : (n_blocks, tk, tn)  only the nonzero S^T tiles
      src_kblk  : (nj*max_nnz,) i32   source k-block index per (j, slot)
      st_slot   : (nj*max_nnz,) i32   compacted S^T tile index per (j, slot)
      kcnt      : (nj,)         i32   number of valid slots per output block j
      max_nnz   : int                 k-axis grid extent (slots per output block)
    """
    src, valid = _inverse_map(degree, H, W)
    HW = H * W
    nj = HWp // tn

    out_idx = np.arange(HW, dtype=np.int64)
    src_v, out_v = src[valid], out_idx[valid]
    kb, jb = src_v // tk, out_v // tn
    pair = kb * nj + jb
    uniq = np.unique(pair)
    n_blocks = max(int(uniq.size), 1)

    st_blocks = np.zeros((n_blocks, tk, tn), dtype=np.float32)
    if uniq.size:
        slots = np.searchsorted(uniq, pair)
        st_blocks[slots, src_v - kb * tk, out_v - jb * tn] = 1.0

    per_j = [[] for _ in range(nj)]
    for slot, p in enumerate(uniq.tolist()):
        per_j[int(p) % nj].append((int(p) // nj, slot))
    max_nnz = max(max((len(l) for l in per_j), default=1), 1)

    src_kblk = np.zeros((nj, max_nnz), dtype=np.int32)
    st_slot = np.zeros((nj, max_nnz), dtype=np.int32)
    kcnt = np.zeros((nj,), dtype=np.int32)
    for jj, lst in enumerate(per_j):
        kcnt[jj] = len(lst)
        for t in range(max_nnz):
            kb_i, sl = lst[min(t, len(lst) - 1)] if lst else (0, 0)
            src_kblk[jj, t], st_slot[jj, t] = kb_i, sl        # pad = repeat last (skipped)

    st_dev = jnp.asarray(st_blocks, dtype=jnp.dtype(dtype_name))
    return (st_dev, jnp.asarray(src_kblk.reshape(-1)),
            jnp.asarray(st_slot.reshape(-1)), jnp.asarray(kcnt), max_nnz)


# --------------------------------------------------------------------------- #
# kernel
# --------------------------------------------------------------------------- #
def _rotate_kernel(src_kblk_ref, st_slot_ref, kcnt_ref,   # scalar-prefetch (SMEM)
                   x_ref, st_ref, o_ref, acc_ref):
    # x_ref:  (tb, tk)     batch tile x K-block of flattened input pixels
    # st_ref: (1, tk, tn)  one nonzero one-hot S^T tile
    # o_ref:  (tb, tn)     output tile;  acc_ref: f32 accumulator scratch
    del src_kblk_ref, st_slot_ref                            # used by index_maps only
    j = pl.program_id(1)
    k = pl.program_id(2)

    @pl.when(k == 0)
    def _zero():
        acc_ref[...] = jnp.zeros_like(acc_ref)

    @pl.when(k < kcnt_ref[j])                                # skip padded duplicate slots
    def _accumulate():
        acc_ref[...] += jnp.dot(x_ref[...], st_ref[0],
                                preferred_element_type=jnp.float32)

    @pl.when(k == pl.num_programs(2) - 1)
    def _store():
        o_ref[...] = acc_ref[...].astype(o_ref.dtype)


# --------------------------------------------------------------------------- #
# wrapper
# --------------------------------------------------------------------------- #
def _layout_fast_path(x: jnp.ndarray, degree: float):
    """Pure layout permutation for exact 0/90/180/270-degree rotations."""
    H, W = x.shape[-2], x.shape[-1]
    d = float(degree) % 360.0
    eps = 1e-9
    if abs(d) < eps or abs(d - 360.0) < eps:
        return x
    if abs(d - 180.0) < eps:
        return jnp.flip(x, axis=(-2, -1))
    if H == W:                                   # 90/270 keep shape only when square
        if abs(d - 90.0) < eps:
            return jnp.rot90(x, k=1, axes=(-2, -1))
        if abs(d - 270.0) < eps:
            return jnp.rot90(x, k=3, axes=(-2, -1))
    return None


def _choose_tiles(B: int, HWp: int, itemsize: int, vmem_budget: int, tb_cap: int):
    sub = max(8, 32 // itemsize)                 # 8 rows f32, 16 rows bf16
    align = 256 if HWp % 256 == 0 else 128       # v6e/v7x MXU is 256 wide

    tb = min(_round_up(B, sub), tb_cap)
    if B % sub == 0 and B % tb != 0:             # divisor of B -> no batch padding
        best, d = sub, sub
        while d <= min(B, tb_cap):
            if B % d == 0:
                best = d
            d += sub
        tb = best

    tn = _largest_aligned_divisor(HWp, 512, align)
    tk = _largest_aligned_divisor(HWp, 512, align)

    def est(tb_, tk_, tn_):                      # double-buffered working set
        return (2 * tb_ * tk_ * itemsize + 2 * tk_ * tn_ * itemsize
                + 2 * tb_ * tn_ * itemsize + 2 * tb_ * tn_ * 4)

    while est(tb, tk, tn) > vmem_budget and tb > sub:
        tb = max(sub, _round_up(tb // 2, sub))
    while est(tb, tk, tn) > vmem_budget and tk > align:
        tk = _largest_aligned_divisor(HWp, tk - align, align)
    while est(tb, tk, tn) > vmem_budget and tn > 128:
        tn = _largest_aligned_divisor(HWp, max(tn - 128, 128), 128)

    Bp = _round_up(B, tb)
    # v7x has 2 TensorCores per chip: give the parallel axes >= 2 grid steps.
    if (Bp // tb) * (HWp // tn) == 1:
        if HWp >= 256:
            tn = _largest_aligned_divisor(HWp, max(tn // 2, 128), 128)
        elif tb > sub:
            tb = max(sub, _round_up(tb // 2, sub))
            Bp = _round_up(B, tb)
    return tb, tk, tn, Bp


def fixed_degree_rotation(x: jnp.ndarray, degree: float, *,
                          use_fast_path: bool = True) -> jnp.ndarray:
    """Rotate a (..., H, W) batch of images by a fixed degree (Pallas TPU kernel)."""
    *lead, H, W = x.shape
    orig_dtype = x.dtype

    if use_fast_path:
        fast = _layout_fast_path(x, degree)
        if fast is not None:
            return fast

    B = int(math.prod(lead))
    HW = H * W
    HWp = _round_up(HW, 128)                     # lane-dense, 128-aligned K/N

    # bf16 keeps the bf16 MXU path (exact: S is strictly 0/1); everything else
    # (f32 / integer images) is routed once through f32 in the wrapper.
    compute_dtype = jnp.bfloat16 if x.dtype == jnp.bfloat16 else jnp.float32
    itemsize = jnp.dtype(compute_dtype).itemsize

    vmem_cap = _vmem_capacity_bytes()
    vmem_limit = max(32 << 20, min((3 * vmem_cap) // 4, 100 << 20))
    vmem_budget = min(vmem_limit // 2, 48 << 20)
    tb_cap = 1024 if vmem_cap >= (96 << 20) else 512

    tb, tk, tn, Bp = _choose_tiles(B, HWp, itemsize, vmem_budget, tb_cap)
    nj = HWp // tn

    st_blocks, src_kblk, st_slot, kcnt, max_nnz = _rotation_tables(
        float(degree), H, W, HWp, tk, tn, jnp.dtype(compute_dtype).name)

    x_flat = x.reshape(B, HW)
    if x_flat.dtype != compute_dtype:
        x_flat = x_flat.astype(compute_dtype)    # single wrapper upcast (int images)
    if Bp != B or HWp != HW:
        x_flat = jnp.pad(x_flat, ((0, Bp - B), (0, HWp - HW)))

    MAXK = max_nnz

    def x_map(i, j, k, src_kblk_ref, st_slot_ref, kcnt_ref):
        return (i, src_kblk_ref[j * MAXK + k])

    def st_map(i, j, k, src_kblk_ref, st_slot_ref, kcnt_ref):
        return (st_slot_ref[j * MAXK + k], 0, 0)

    def o_map(i, j, k, src_kblk_ref, st_slot_ref, kcnt_ref):
        return (i, j)

    out_flat = pl.pallas_call(
        _rotate_kernel,
        out_shape=jax.ShapeDtypeStruct((Bp, HWp), compute_dtype),
        grid_spec=pltpu.PrefetchScalarGridSpec(
            num_scalar_prefetch=3,
            grid=(Bp // tb, nj, max_nnz),
            in_specs=[
                pl.BlockSpec((tb, tk), x_map),        # x rows, source K block
                pl.BlockSpec((1, tk, tn), st_map),    # compacted nonzero S^T tile
            ],
            out_specs=pl.BlockSpec((tb, tn), o_map),
            scratch_shapes=[pltpu.VMEM((tb, tn), jnp.float32)],
        ),
        compiler_params=pltpu.CompilerParams(
            dimension_semantics=("parallel", "parallel", "arbitrary"),
            vmem_limit_bytes=vmem_limit,
        ),
    )(src_kblk, st_slot, kcnt, x_flat, st_blocks)

    out = out_flat[:B, :HW].reshape(*lead, H, W)
    if out.dtype != orig_dtype:
        out = out.astype(orig_dtype)
    return out


def _reference_rotation_nn(x: jnp.ndarray, degree: float) -> jnp.ndarray:
    """Pure-JAX nearest-neighbour reference (plain gather on the same inverse map)."""
    *lead, H, W = x.shape
    src, valid = _inverse_map(degree, H, W)
    xf = x.reshape(-1, H * W)
    g = jnp.take(xf, jnp.asarray(src.astype(np.int32)), axis=1)
    g = jnp.where(jnp.asarray(valid)[None, :], g, jnp.zeros((), x.dtype))
    return g.reshape(*lead, H, W)


if __name__ == "__main__":
    key = jax.random.PRNGKey(0)
    x = jax.random.uniform(key, (2, 4, 16, 16), dtype=jnp.float32)

    # 90-degree counterclockwise: layout fast path == rot90 (docstring example).
    ref90 = jnp.rot90(x, k=1, axes=(-2, -1))
    out90_fast = jax.block_until_ready(fixed_degree_rotation(x, 90.0))
    assert out90_fast.shape == x.shape and out90_fast.dtype == x.dtype
    assert bool(jnp.all(out90_fast == ref90)), "90-degree fast path mismatch"

    # Same angle through the general Pallas gather-matmul kernel (exact).
    out90 = jax.block_until_ready(fixed_degree_rotation(x, 90.0, use_fast_path=False))
    assert bool(jnp.all(out90 == ref90)), "90-degree Pallas kernel mismatch"

    # 180 degrees (flip fast path).
    out180 = jax.block_until_ready(fixed_degree_rotation(x, 180.0))
    assert bool(jnp.all(out180 == jnp.rot90(x, k=2, axes=(-2, -1)))), "180-degree mismatch"

    # Arbitrary angle through the Pallas kernel vs a pure-JAX NN gather reference.
    out33 = jax.block_until_ready(fixed_degree_rotation(x, 33.0))
    ref33 = _reference_rotation_nn(x, 33.0)
    assert bool(jnp.all(out33 == ref33)), "33-degree rotation mismatch"

    # bf16 stays exact on the bf16 MXU path (S is strictly 0/1).
    xb = x.astype(jnp.bfloat16)
    outb = jax.block_until_ready(fixed_degree_rotation(xb, 90.0, use_fast_path=False))
    assert outb.dtype == jnp.bfloat16
    assert bool(jnp.all(outb == jnp.rot90(xb, k=1, axes=(-2, -1)))), "bf16 mismatch"

    print("KERNEL_OK")
</pallas_src>

<mosaic_0001>
module attributes {stable_mosaic.version = 11 : i64} {
  func.func @_rotate_kernel(%arg0: i32, %arg1: i32, %arg2: i32, %arg3: memref<2xi32, #tpu.memory_space<smem>>, %arg4: memref<2xi32, #tpu.memory_space<smem>>, %arg5: memref<2xi32, #tpu.memory_space<smem>>, %arg6: memref<8x256xf32, #tpu.memory_space<vmem>>, %arg7: memref<1x256x128xf32, #tpu.memory_space<vmem>>, %arg8: memref<8x128xf32, #tpu.memory_space<vmem>>, %arg9: memref<8x128xf32, #tpu.memory_space<vmem>>) attributes {dimension_semantics = [#tpu.dimension_semantics<parallel>, #tpu.dimension_semantics<parallel>, #tpu.dimension_semantics<arbitrary>], iteration_bounds = array<i64: 1, 2, 1>, scalar_prefetch = 3 : i64, scratch_operands = 1 : i64, tpu.core_type = #tpu.core_type<tc>, window_params = [{transform_indices = @transform_0, window_bounds = array<i64: 8, 256>}, {transform_indices = @transform_1, window_bounds = array<i64: 1, 256, 128>}, {transform_indices = @transform_2, window_bounds = array<i64: 8, 128>}]} {
    %c0_i32 = arith.constant 0 : i32
    %0 = arith.cmpi eq, %arg2, %c0_i32 : i32
    %1 = arith.extui %0 : i1 to i32
    %c0_i32_0 = arith.constant 0 : i32
    %2 = arith.cmpi ne, %1, %c0_i32_0 : i32
    scf.if %2 {
      %cst = arith.constant 0.000000e+00 : f32
      %11 = vector.broadcast %cst : f32 to vector<8x128xf32>
      %c0 = arith.constant 0 : index
      %c0_4 = arith.constant 0 : index
      %12 = vector.load %arg9[%c0, %c0_4] : memref<8x128xf32, #tpu.memory_space<vmem>>, vector<8x128xf32>
      tpu.vector_store %arg9[%c0, %c0_4], %11 {strides = array<i32>} : memref<8x128xf32, #tpu.memory_space<vmem>>, vector<8x128xf32>,
    } else {
    }
    %3 = arith.index_cast %arg1 : i32 to index
    %4 = memref.load %arg5[%3] : memref<2xi32, #tpu.memory_space<smem>>
    %5 = arith.cmpi slt, %arg2, %4 : i32
    %6 = arith.extui %5 : i1 to i32
    %c0_i32_1 = arith.constant 0 : i32
    %7 = arith.cmpi ne, %6, %c0_i32_1 : i32
    scf.if %7 {
      %c0 = arith.constant 0 : index
      %c0_4 = arith.constant 0 : index
      %11 = vector.load %arg9[%c0, %c0_4] : memref<8x128xf32, #tpu.memory_space<vmem>>, vector<8x128xf32>
      %c0_5 = arith.constant 0 : index
      %c0_6 = arith.constant 0 : index
      %12 = vector.load %arg6[%c0_5, %c0_6] : memref<8x256xf32, #tpu.memory_space<vmem>>, vector<8x256xf32>
      %c0_7 = arith.constant 0 : index
      %c0_8 = arith.constant 0 : index
      %c0_9 = arith.constant 0 : index
      %13 = vector.load %arg7[%c0_7, %c0_8, %c0_9] : memref<1x256x128xf32, #tpu.memory_space<vmem>>, vector<1x256x128xf32>
      %14 = vector.shape_cast %13 : vector<1x256x128xf32> to vector<256x128xf32>
      %cst = arith.constant dense<0.000000e+00> : vector<8x128xf32>
      %15 = tpu.matmul %12, %14, %cst {dimension_numbers = #tpu.dot_dimension_numbers<[1], [0], [0], [1], [0, 0, 1, 1], [], []>} : vector<8x256xf32>, vector<256x128xf32>, vector<8x128xf32> -> vector<8x128xf32>
      %16 = arith.addf %11, %15 : vector<8x128xf32>
      %c0_10 = arith.constant 0 : index
      %c0_11 = arith.constant 0 : index
      %17 = vector.load %arg9[%c0_10, %c0_11] : memref<8x128xf32, #tpu.memory_space<vmem>>, vector<8x128xf32>
      tpu.vector_store %arg9[%c0_10, %c0_11], %16 {strides = array<i32>} : memref<8x128xf32, #tpu.memory_space<vmem>>, vector<8x128xf32>,
    } else {
    }
    %c0_i32_2 = arith.constant 0 : i32
    %8 = arith.cmpi eq, %arg2, %c0_i32_2 : i32
    %9 = arith.extui %8 : i1 to i32
    %c0_i32_3 = arith.constant 0 : i32
    %10 = arith.cmpi ne, %9, %c0_i32_3 : i32
    scf.if %10 {
      %c0 = arith.constant 0 : index
      %c0_4 = arith.constant 0 : index
      %11 = vector.load %arg9[%c0, %c0_4] : memref<8x128xf32, #tpu.memory_space<vmem>>, vector<8x128xf32>
      %c0_5 = arith.constant 0 : index
      %c0_6 = arith.constant 0 : index
      %12 = vector.load %arg8[%c0_5, %c0_6] : memref<8x128xf32, #tpu.memory_space<vmem>>, vector<8x128xf32>
      tpu.vector_store %arg8[%c0_5, %c0_6], %11 {strides = array<i32>} : memref<8x128xf32, #tpu.memory_space<vmem>>, vector<8x128xf32>,
    } else {
    }
    return
  }
  func.func @transform_0(%arg0: i32, %arg1: i32, %arg2: i32, %arg3: memref<2xi32, #tpu.memory_space<smem>>, %arg4: memref<2xi32, #tpu.memory_space<smem>>, %arg5: memref<2xi32, #tpu.memory_space<smem>>) -> (i32, i32) {
    %c1_i32 = arith.constant 1 : i32
    %0 = arith.muli %arg1, %c1_i32 : i32
    %1 = arith.addi %0, %arg2 : i32
    %2 = arith.index_cast %1 : i32 to index
    %3 = memref.load %arg3[%2] : memref<2xi32, #tpu.memory_space<smem>>
    %c0_i32 = arith.constant 0 : i32
    return %arg0, %3 : i32, i32
  }
  func.func @transform_1(%arg0: i32, %arg1: i32, %arg2: i32, %arg3: memref<2xi32, #tpu.memory_space<smem>>, %arg4: memref<2xi32, #tpu.memory_space<smem>>, %arg5: memref<2xi32, #tpu.memory_space<smem>>) -> (i32, i32, i32) {
    %c1_i32 = arith.constant 1 : i32
    %0 = arith.muli %arg1, %c1_i32 : i32
    %1 = arith.addi %0, %arg2 : i32
    %2 = arith.index_cast %1 : i32 to index
    %3 = memref.load %arg4[%2] : memref<2xi32, #tpu.memory_space<smem>>
    %c0_i32 = arith.constant 0 : i32
    %c0_i32_0 = arith.constant 0 : i32
    %c0_i32_1 = arith.constant 0 : i32
    return %3, %c0_i32, %c0_i32_0 : i32, i32, i32
  }
  func.func @transform_2(%arg0: i32, %arg1: i32, %arg2: i32, %arg3: memref<2xi32, #tpu.memory_space<smem>>, %arg4: memref<2xi32, #tpu.memory_space<smem>>, %arg5: memref<2xi32, #tpu.memory_space<smem>>) -> (i32, i32) {
    %c0_i32 = arith.constant 0 : i32
    return %arg0, %arg1 : i32, i32
  }
}

</mosaic_0001>

<llo_original>
// kernel: tpu_custom_call.1
$region0: #{tpu_custom_call.1}
  #allocation0 [shape = 'u32[]', space=smem, size = 0x4, offset = 0x4, fixed_abs, tag = 'smem constant byte address 0x4 - core index']
  #allocation1 [shape = 'u32[144,128]{1,0:T(1,128)}', space=vmem, size = 0x12000, scoped, tag = 'internal scratch']
  #allocation2 [shape = 'f32[8,128]{1,0:T(8,128)}', space=vmem, size = 0x1000, scoped, tag = 'scratch operand']
  #allocation3 [shape = 's32[1]{0}', space=sflag, size = 0x4, scoped, tag = 'scoped memory for tpu_custom_call.1']
  #allocation4 [shape = 'u8[512]{0}', space=smem, size = 0x200, scoped, tag = 'prefetched SMEM operand 0']
  #allocation5 [shape = 'u8[512]{0}', space=smem, size = 0x200, scoped, tag = 'prefetched SMEM operand 1']
  #allocation6 [shape = 'u8[512]{0}', space=smem, size = 0x200, scoped, tag = 'prefetched SMEM operand 2']
  %s0 = inlined_call_operand.hbm [shape: s32[2], index: 0, kind: input, shape index: {}]
  %s1 = inlined_call_operand.vmem [shape: s32[2], index: 1, kind: input, shape index: {}]
  %s2 = inlined_call_operand.vmem [shape: s32[2], index: 2, kind: input, shape index: {}]
  %s3 = inlined_call_operand.hbm [shape: f32[8,256], index: 3, kind: input, shape index: {}]
  %s4 = inlined_call_operand.hbm [shape: f32[2,256,128], index: 4, kind: input, shape index: {}]
  %s5 = inlined_call_operand.hbm [shape: f32[8,256], index: 5, kind: output, shape index: {}]
  %s6 = sld [smem:[#allocation0]]
  $region61: #{tpu_custom_call.1} parent=0
    _
  %s8 = ssub.s32 1, %s6
  %s9 = scalar_select 0, %s8, %s6
  %11 = dma.hbm_to_smem %s0, 16, [#allocation4], [#allocation3]
  %s12 = sshll.u32 %s1, 4
  %s13 = int_to_ptr.vmem [resolvable:$true] %s12
  %15 = dma.vmem_to_smem %s13, 16, [#allocation5], [#allocation3]
  %s16 = sshll.u32 %s2, 4
  %s17 = int_to_ptr.vmem [resolvable:$true] %s16
  %19 = dma.vmem_to_smem %s17, 16, [#allocation6], [#allocation3]
  %20 = dma.done [#allocation3], 48
  %21 = sfence
  $region1: #{tpu_custom_call.1} parent=0
    #allocation7 [shape = 'u8[16384]{0}', space=vmem, size = 0x4000, scoped, tag = 'input window, operand 3']
    #allocation8 [shape = 's32[2]{0}', space=sflag, size = 0x8, scoped, tag = 'scoped memory for tpu_custom_call.1']
    #allocation9 [shape = 's32[2]{0}', space=sflag, size = 0x8, scoped, tag = 'scoped memory for tpu_custom_call.1']
    #allocation10 [shape = 'u8[262144]{0}', space=vmem, size = 0x40000, scoped, tag = 'input window, operand 4']
    #allocation11 [shape = 's32[2]{0}', space=sflag, size = 0x8, scoped, tag = 'scoped memory for tpu_custom_call.1']
    #allocation12 [shape = 'u8[8192]{0}', space=vmem, size = 0x2000, scoped, tag = 'output window, operand 0']
    %22 = vsyncpa [#allocation8], 0
    %s23 = scalar_lea.sflag [#allocation8], 1
    %24 = vsyncpa %s23, 0
    %25 = vsyncpa [#allocation11], 0
    %s26 = scalar_lea.sflag [#allocation11], 1
    %27 = vsyncpa %s26, 0
    %28 = vsyncpa [#allocation9], 0
    %s29 = scalar_lea.sflag [#allocation9], 1
    %30 = vsyncpa %s29, 0
    loop: start=0, step=1, limit=4
    $region2: #{tpu_custom_call.1} parent=1 // loop_pre_header
      _
    $region3: #{tpu_custom_call.1} parent=1 // loop_header
      %s32 = sphi 0, %s36
      %p33 = scmp.ge.s32.totalorder %s32, 4
      %s39 = sphi 0, %s58
      %s40 = sphi 0, %s54
      %s41 = sphi 0, %s50
      %s42 = sphi 0, %s39
      %s43 = sphi 0, %s40
      %s44 = sphi 0, %s41
      %s45 = sphi 0, %s42
      %s46 = sphi 0, %s43
      %s47 = sphi 0, %s44
      %s67 = sphi 0, %s69
      %s70 = sphi 0, %s67
      %s71 = sphi 0, %s70
      %s87 = sphi 0, %s71
      %s97 = sphi 0, %s99
      %s100 = sphi 0, %s97
      %s101 = sphi 0, %s100
      %s117 = sphi 0, %s101
      %s125 = sphi 0, %s127
      %s128 = sphi 0, %s125
      %s129 = sphi 0, %s128
      %s145 = sphi 0, %s129
    $region4: #{tpu_custom_call.1} parent=1 // loop_header_branch
      %35 = sbr.rel (%p33) target = $region8
    $region5: #{tpu_custom_call.1} parent=1 // loop_body
      %s37 = ssub.s32 %s32, 1
      %s38 = ssub.s32 %s32, 2
      %s48 = sadd.s32 1, %s41
      %p49 = scmp.ge.s32.totalorder %s48, 1
      %s50 = scalar_select %p49, 0, %s48
      %s51 = sadd.s32 1, %s40
      %s52 = scalar_select %p49, %s51, %s40
      %p53 = scmp.ge.s32.totalorder %s52, 2
      %s54 = scalar_select %p53, 0, %s52
      %s55 = sadd.s32 1, %s39
      %s56 = scalar_select %p53, %s55, %s39
      %p57 = scmp.ge.s32.totalorder %s56, 1
      %s58 = scalar_select %p57, 0, %s56
      %s59 = sadd.s32 %s40, %s41
      %s60 = sld [smem:[#allocation4 + %s59]]
      %s61 = sadd.s32 %s54, %s50
      %s62 = sld [smem:[#allocation4 + %s61]]
      %s63 = ssub.s32 %s39, %s58
      %s64 = ssub.s32 %s60, %s62
      %s65 = sor.u32 %s63, %s64
      %p66 = scmp.eq.s32.totalorder %s65, 0
      %s68 = sadd.s32 %s67, 1
      %s69 = scalar_select %p66, %s67, %s68
      %p72 = pneg %p66
      %p73 = scmp.eq.s32.totalorder %s32, 1
      %p74 = por %p72, %p73
      %p75 = scmp.ne.s32.totalorder %s67, %s70
      %p76 = scmp.eq.s32.totalorder %s32, 0
      %p77 = por %p75, %p76
      %p78 = scmp.ne.s32.totalorder %s67, %s70
      %p79 = scmp.eq.s32.totalorder %s37, 1
      %p80 = por %p78, %p79
      %p81 = scmp.ne.s32.totalorder %s70, %s71
      %p82 = scmp.eq.s32.totalorder %s37, 0
      %p83 = por %p81, %p82
      %p84 = scmp.ne.s32.totalorder %s70, %s71
      %p85 = scmp.eq.s32.totalorder %s38, 1
      %p86 = por %p84, %p85
      %p88 = scmp.ne.s32.totalorder %s71, %s87
      %p89 = scmp.eq.s32.totalorder %s38, 0
      %p90 = por %p88, %p89
      %s91 = sadd.s32 %s40, %s41
      %s92 = sld [smem:[#allocation5 + %s91]]
      %s93 = sadd.s32 %s54, %s50
      %s94 = sld [smem:[#allocation5 + %s93]]
      %s95 = ssub.s32 %s92, %s94
      %p96 = scmp.eq.s32.totalorder %s95, 0
      %s98 = sadd.s32 %s97, 1
      %s99 = scalar_select %p96, %s97, %s98
      %p102 = pneg %p96
      %p103 = scmp.eq.s32.totalorder %s32, 1
      %p104 = por %p102, %p103
      %p105 = scmp.ne.s32.totalorder %s97, %s100
      %p106 = scmp.eq.s32.totalorder %s32, 0
      %p107 = por %p105, %p106
      %p108 = scmp.ne.s32.totalorder %s97, %s100
      %p109 = scmp.eq.s32.totalorder %s37, 1
      %p110 = por %p108, %p109
      %p111 = scmp.ne.s32.totalorder %s100, %s101
      %p112 = scmp.eq.s32.totalorder %s37, 0
      %p113 = por %p111, %p112
      %p114 = scmp.ne.s32.totalorder %s100, %s101
      %p115 = scmp.eq.s32.totalorder %s38, 1
      %p116 = por %p114, %p115
      %p118 = scmp.ne.s32.totalorder %s101, %s117
      %p119 = scmp.eq.s32.totalorder %s38, 0
      %p120 = por %p118, %p119
      %s121 = ssub.s32 %s39, %s58
      %s122 = ssub.s32 %s40, %s54
      %s123 = sor.u32 %s121, %s122
      %p124 = scmp.eq.s32.totalorder %s123, 0
      %s126 = sadd.s32 %s125, 1
      %s127 = scalar_select %p124, %s125, %s126
      %p130 = pneg %p124
      %p131 = scmp.eq.s32.totalorder %s32, 1
      %p132 = por %p130, %p131
      %p133 = scmp.ne.s32.totalorder %s125, %s128
      %p134 = scmp.eq.s32.totalorder %s32, 0
      %p135 = por %p133, %p134
      %p136 = scmp.ne.s32.totalorder %s125, %s128
      %p137 = scmp.eq.s32.totalorder %s37, 1
      %p138 = por %p136, %p137
      %p139 = scmp.ne.s32.totalorder %s128, %s129
      %p140 = scmp.eq.s32.totalorder %s37, 0
      %p141 = por %p139, %p140
      %p142 = scmp.ne.s32.totalorder %s128, %s129
      %p143 = scmp.eq.s32.totalorder %s38, 1
      %p144 = por %p142, %p143
      %p146 = scmp.ne.s32.totalorder %s129, %s145
      %p147 = scmp.eq.s32.totalorder %s38, 0
      %p148 = por %p146, %p147
      %p149 = scmp.le.s32.totalorder 1, %s32
      %p150 = scmp.lt.s32.totalorder %s32, 3
      %p151 = pnand %p149, %p150
      %p152 = pneg %p151
      // Predicated region
      $region9: #{tpu_custom_call.1} parent=5 // pred_check
        _
      $region10: #{tpu_custom_call.1} parent=5 // pred_check_branch
        %154 = sbr.rel (%p151) target = $region12
      $region11: #{tpu_custom_call.1} parent=5 // pred_region
        %s155 = ssub.s32 %s32, 1
      $region12: #{tpu_custom_call.1} parent=5 // pred_fallthru
        _
      %p156 = scmp.lt.s32.totalorder %s32, 2
      // Predicated region
      $region13: #{tpu_custom_call.1} parent=5 // pred_check
        %p157 = pneg %p156
      $region14: #{tpu_custom_call.1} parent=5 // pred_check_branch
        %159 = sbr.rel (%p157) target = $region16
      $region15: #{tpu_custom_call.1} parent=5 // pred_region
        // Predicated region
        $region17: #{tpu_custom_call.1} parent=15 // pred_check
          %p160 = pneg %p77
        $region18: #{tpu_custom_call.1} parent=15 // pred_check_branch
          %162 = sbr.rel (%p160) target = $region20
        $region19: #{tpu_custom_call.1} parent=15 // pred_region
          %s163 = sand.u32 %s67, 1
          %s164 = scalar_lea.sflag [#allocation8], %s163
          %s165 = sand.u32 %s67, 1
          %s166 = smul.addr %s165, 16
          %s167 = scalar_lea.vmem [#allocation7], %s166
          %s168 = sadd.s32 %s40, %s41
          %s169 = sld [smem:[#allocation4 + %s168]]
          %s170 = smul.u32 2, %s169
          %s172 = ssub.s32 256, 256
          %173 = vsyncadd %s164, %s172
          %s174 = smul.addr %s39, 2
          %s175 = sadd.s32 %s170, %s174
          %s176 = smul.addr %s175, 128
          %s177 = scalar_lea.hbm %s3, %s176
          %s179 = sshll.u32 %s167, 4
          %s180 = int_to_ptr.vmem [resolvable:$true] %s179
          %182 = dma.hbm_to_vmem [thread:$0]  %s177, 256, %s180, %s164
        $region20: #{tpu_custom_call.1} parent=15 // pred_fallthru
          _
        // Predicated region
        $region21: #{tpu_custom_call.1} parent=15 // pred_check
          %p183 = pneg %p107
        $region22: #{tpu_custom_call.1} parent=15 // pred_check_branch
          %185 = sbr.rel (%p183) target = $region24
        $region23: #{tpu_custom_call.1} parent=15 // pred_region
          %s186 = sand.u32 %s97, 1
          %s187 = scalar_lea.sflag [#allocation11], %s186
          %s188 = sand.u32 %s97, 1
          %s189 = smul.addr %s188, 256
          %s190 = scalar_lea.vmem [#allocation10], %s189
          %s191 = sadd.s32 %s40, %s41
          %s192 = sld [smem:[#allocation5 + %s191]]
          %s194 = ssub.s32 4096, 4096
          %195 = vsyncadd %s187, %s194
          %s196 = smul.addr %s192, 32
          %s197 = smul.addr %s196, 128
          %s198 = scalar_lea.hbm %s4, %s197
          %s199 = sshll.u32 %s190, 4
          %s200 = int_to_ptr.vmem [resolvable:$true] %s199
          %205 = dma.hbm_to_vmem [thread:$0]  %s198, 4096, %s200, %s187, 128, 128, 8
        $region24: #{tpu_custom_call.1} parent=15 // pred_fallthru
          _
      $region16: #{tpu_custom_call.1} parent=5 // pred_fallthru
        _
      %p206 = scmp.le.s32.totalorder 1, %s32
      %p207 = scmp.lt.s32.totalorder %s32, 3
      %p208 = pnand %p206, %p207
      %p209 = pneg %p208
      // Predicated region
      $region25: #{tpu_custom_call.1} parent=5 // pred_check
        _
      $region26: #{tpu_custom_call.1} parent=5 // pred_check_branch
        %211 = sbr.rel (%p208) target = $region28
      $region27: #{tpu_custom_call.1} parent=5 // pred_region
        %s212 = ssub.s32 %s32, 1
        %s213 = sand.u32 %s70, 1
        %s214 = scalar_lea.sflag [#allocation8], %s213
        %s215 = sand.u32 %s70, 1
        %s216 = smul.addr %s215, 16
        %s217 = scalar_lea.vmem [#allocation7], %s216
        // Predicated region
        $region29: #{tpu_custom_call.1} parent=27 // pred_check
          %p218 = pneg %p83
        $region30: #{tpu_custom_call.1} parent=27 // pred_check_branch
          %220 = sbr.rel (%p218) target = $region32
        $region31: #{tpu_custom_call.1} parent=27 // pred_region
          %221 = dma.done %s214, 256
        $region32: #{tpu_custom_call.1} parent=27 // pred_fallthru
          _
        %s222 = sand.u32 %s100, 1
        %s223 = scalar_lea.sflag [#allocation11], %s222
        %s224 = sand.u32 %s100, 1
        %s225 = smul.addr %s224, 256
        %s226 = scalar_lea.vmem [#allocation10], %s225
        // Predicated region
        $region33: #{tpu_custom_call.1} parent=27 // pred_check
          %p227 = pneg %p113
        $region34: #{tpu_custom_call.1} parent=27 // pred_check_branch
          %229 = sbr.rel (%p227) target = $region36
        $region35: #{tpu_custom_call.1} parent=27 // pred_region
          %230 = dma.done %s223, 4096
        $region36: #{tpu_custom_call.1} parent=27 // pred_fallthru
          _
        %s231 = sand.u32 %s70, 1
        %s232 = scalar_lea.sflag [#allocation8], %s231
        %s233 = sand.u32 %s70, 1
        %s234 = smul.addr %s233, 16
        %s235 = scalar_lea.vmem [#allocation7], %s234
        %p236 = pneg %p83
        %p237 = pneg %p80
        %s238 = sand.u32 %s100, 1
        %s239 = scalar_lea.sflag [#allocation11], %s238
        %s240 = sand.u32 %s100, 1
        %s241 = smul.addr %s240, 256
        %s242 = scalar_lea.vmem [#allocation10], %s241
        %p243 = pneg %p113
        %p244 = pneg %p110
        %p245 = pneg %p141
        %p246 = pneg %p138
        %s247 = sand.u32 %s128, 1
        %s248 = scalar_lea.sflag [#allocation9], %s247
        %s249 = sand.u32 %s128, 1
        %s250 = smul.addr %s249, 8
        %s251 = scalar_lea.vmem [#allocation12], %s250
        %s252 = sadd.s32 %s43, %s44
        %s253 = sld [smem:[#allocation4 + %s252]]
        %s254 = smul.u32 2, %s253
        %s255 = sadd.s32 %s43, %s44
        %s256 = sld [smem:[#allocation5 + %s255]]
        %p257 = scmp.eq.s32.totalorder %s44, 0
        // Predicated region
        $region37: #{tpu_custom_call.1} parent=27 // pred_check
          %p258 = pneg %p257
        $region38: #{tpu_custom_call.1} parent=27 // pred_check_branch
          %260 = sbr.rel (%p258) target = $region40
        $region39: #{tpu_custom_call.1} parent=27 // pred_region
          %261 = vst [vmem:[#allocation2] sm:$0xff] 0.0
        $region40: #{tpu_custom_call.1} parent=27 // pred_fallthru
          _
        %s262 = sld [smem:[#allocation6 + %s43]]
        %p263 = scmp.lt.s32.totalorder %s44, %s262
        // Predicated region
        $region41: #{tpu_custom_call.1} parent=27 // pred_check
          %p264 = pneg %p263
        $region42: #{tpu_custom_call.1} parent=27 // pred_check_branch
          %266 = sbr.rel (%p264) target = $region44
        $region43: #{tpu_custom_call.1} parent=27 // pred_region
          %v267 = vld [vmem:[#allocation2] sm:$0xff]
          %v268 = vld [vmem:[%s217] sm:$0xff]
          %v269 = vld [vmem:[%s217 + $0x8] sm:$0xff]
          %v270 = vld [vmem:[%s226] sm:$0xff]
          %v271 = vld [vmem:[%s226 + $0x8] sm:$0xff]
          %v272 = vld [vmem:[%s226 + $0x10] sm:$0xff]
          %v273 = vld [vmem:[%s226 + $0x18] sm:$0xff]
          %v274 = vld [vmem:[%s226 + $0x20] sm:$0xff]
          %v275 = vld [vmem:[%s226 + $0x28] sm:$0xff]
          %v276 = vld [vmem:[%s226 + $0x30] sm:$0xff]
          %v277 = vld [vmem:[%s226 + $0x38] sm:$0xff]
          %v278 = vld [vmem:[%s226 + $0x40] sm:$0xff]
          %v279 = vld [vmem:[%s226 + $0x48] sm:$0xff]
          %v280 = vld [vmem:[%s226 + $0x50] sm:$0xff]
          %v281 = vld [vmem:[%s226 + $0x58] sm:$0xff]
          %v282 = vld [vmem:[%s226 + $0x60] sm:$0xff]
          %v283 = vld [vmem:[%s226 + $0x68] sm:$0xff]
          %v284 = vld [vmem:[%s226 + $0x70] sm:$0xff]
          %v285 = vld [vmem:[%s226 + $0x78] sm:$0xff]
          %v286 = vld [vmem:[%s226 + $0x80] sm:$0xff]
          %v287 = vld [vmem:[%s226 + $0x88] sm:$0xff]
          %v288 = vld [vmem:[%s226 + $0x90] sm:$0xff]
          %v289 = vld [vmem:[%s226 + $0x98] sm:$0xff]
          %v290 = vld [vmem:[%s226 + $0xa0] sm:$0xff]
          %v291 = vld [vmem:[%s226 + $0xa8] sm:$0xff]
          %v292 = vld [vmem:[%s226 + $0xb0] sm:$0xff]
          %v293 = vld [vmem:[%s226 + $0xb8] sm:$0xff]
          %v294 = vld [vmem:[%s226 + $0xc0] sm:$0xff]
          %v295 = vld [vmem:[%s226 + $0xc8] sm:$0xff]
          %v296 = vld [vmem:[%s226 + $0xd0] sm:$0xff]
          %v297 = vld [vmem:[%s226 + $0xd8] sm:$0xff]
          %v298 = vld [vmem:[%s226 + $0xe0] sm:$0xff]
          %v299 = vld [vmem:[%s226 + $0xe8] sm:$0xff]
          %v300 = vld [vmem:[%s226 + $0xf0] sm:$0xff]
          %v301 = vld [vmem:[%s226 + $0xf8] sm:$0xff]
          %302 = vmatprep.subr.mxu0 0.0
          %303 = vmatpush1.msra.mxu0 %v285
          %304 = vmatprep.subr.mxu0 0.0
          %305 = vmatpush1.msra.mxu0 %v284
          %306 = vmatprep.subr.mxu0 0.0
          %307 = vmatpush1.msra.mxu0 %v283
          %308 = vmatprep.subr.mxu0 0.0
          %309 = vmatpush1.msra.mxu0 %v282
          %310 = vmatprep.subr.mxu0 0.0
          %311 = vmatpush1.msra.mxu0 %v281
          %312 = vmatprep.subr.mxu0 0.0
          %313 = vmatpush1.msra.mxu0 %v280
          %314 = vmatprep.subr.mxu0 0.0
          %315 = vmatpush1.msra.mxu0 %v279
          %316 = vmatprep.subr.mxu0 0.0
          %317 = vmatpush1.msra.mxu0 %v278
          %318 = vmatprep.subr.mxu0 0.0
          %319 = vmatpush1.msra.mxu0 %v277
          %320 = vmatprep.subr.mxu0 0.0
          %321 = vmatpush1.msra.mxu0 %v276
          %322 = vmatprep.subr.mxu0 0.0
          %323 = vmatpush1.msra.mxu0 %v275
          %324 = vmatprep.subr.mxu0 0.0
          %325 = vmatpush1.msra.mxu0 %v274
          %326 = vmatprep.subr.mxu0 0.0
          %327 = vmatpush1.msra.mxu0 %v273
          %328 = vmatprep.subr.mxu0 0.0
          %329 = vmatpush1.msra.mxu0 %v272
          %330 = vmatprep.subr.mxu0 0.0
          %331 = vmatpush1.msra.mxu0 %v271
          %332 = vmatprep.subr.mxu0 0.0
          %333 = vmatpush1.msra.mxu0 %v270
          %334 = vmatprep.subr.mxu0 0.0
          %335 = vmatpush2.msra.mxu0 %v301
          %336 = vmatprep.subr.mxu0 0.0
          %337 = vmatpush2.msra.mxu0 %v300
          %338 = vmatprep.subr.mxu0 0.0
          %339 = vmatpush2.msra.mxu0 %v299
          %340 = vmatprep.subr.mxu0 0.0
          %341 = vmatpush2.msra.mxu0 %v298
          %342 = vmatprep.subr.mxu0 0.0
          %343 = vmatpush2.msra.mxu0 %v297
          %344 = vmatprep.subr.mxu0 0.0
          %345 = vmatpush2.msra.mxu0 %v296
          %346 = vmatprep.subr.mxu0 0.0
          %347 = vmatpush2.msra.mxu0 %v295
          %348 = vmatprep.subr.mxu0 0.0
          %349 = vmatpush2.msra.mxu0 %v294
          %350 = vmatprep.subr.mxu0 0.0
          %351 = vmatpush2.msra.mxu0 %v293
          %352 = vmatprep.subr.mxu0 0.0
          %353 = vmatpush2.msra.mxu0 %v292
          %354 = vmatprep.subr.mxu0 0.0
          %355 = vmatpush2.msra.mxu0 %v291
          %356 = vmatprep.subr.mxu0 0.0
          %357 = vmatpush2.msra.mxu0 %v290
          %358 = vmatprep.subr.mxu0 0.0
          %359 = vmatpush2.msra.mxu0 %v289
          %360 = vmatprep.subr.mxu0 0.0
          %361 = vmatpush2.msra.mxu0 %v288
          %362 = vmatprep.subr.mxu0 0.0
          %363 = vmatpush2.msra.mxu0 %v287
          %364 = vmatprep.subr.mxu0 0.0
          %365 = vmatpush2.msra.mxu0 %v286
          %366 = vmatprep.mubr.f32.mxu0 %v269
          %367 = vmatmul.mubr.f32.gmra.mxu0 %v268
          %v368 = vpop.f32.mrf.mxu0
          %v369 = vadd.f32 0.0, %v368
          %v370 = vpop.f32.mrf.mxu0
          %371 = vdwg.mxu0
          %v372 = vadd.f32 %v267, %v369
          %373 = vst [vmem:[#allocation2] sm:$0xff] %v372
        $region44: #{tpu_custom_call.1} parent=27 // pred_fallthru
          _
        // Predicated region
        $region45: #{tpu_custom_call.1} parent=27 // pred_check
          %p374 = pneg %p257
        $region46: #{tpu_custom_call.1} parent=27 // pred_check_branch
          %376 = sbr.rel (%p374) target = $region48
        $region47: #{tpu_custom_call.1} parent=27 // pred_region
          %v377 = vld [vmem:[#allocation2] sm:$0xff]
          %378 = vst [vmem:[%s251] sm:$0xff] %v377
        $region48: #{tpu_custom_call.1} parent=27 // pred_fallthru
          _
        %s379 = sand.u32 %s128, 1
        %s380 = scalar_lea.sflag [#allocation9], %s379
        %s381 = sand.u32 %s128, 1
        %s382 = smul.addr %s381, 8
        %s383 = scalar_lea.vmem [#allocation12], %s382
        // Predicated region
        $region49: #{tpu_custom_call.1} parent=27 // pred_check
          %p384 = pneg %p138
        $region50: #{tpu_custom_call.1} parent=27 // pred_check_branch
          %386 = sbr.rel (%p384) target = $region52
        $region51: #{tpu_custom_call.1} parent=27 // pred_region
          %s388 = ssub.s32 128, 128
          %389 = vsyncadd %s380, %s388
          %s390 = smul.addr %s42, 2
          %s391 = sadd.s32 %s43, %s390
          %s392 = smul.addr %s391, 128
          %s393 = scalar_lea.hbm %s5, %s392
          %s395 = sshll.u32 %s383, 4
          %s396 = int_to_ptr.vmem [resolvable:$true] %s395
          %398 = dma.vmem_to_hbm [thread:$0]  %s396, 128, %s393, %s380
        $region52: #{tpu_custom_call.1} parent=27 // pred_fallthru
          _
      $region28: #{tpu_custom_call.1} parent=5 // pred_fallthru
        _
      %p399 = scmp.le.s32.totalorder 2, %s32
      // Predicated region
      $region53: #{tpu_custom_call.1} parent=5 // pred_check
        %p400 = pneg %p399
      $region54: #{tpu_custom_call.1} parent=5 // pred_check_branch
        %402 = sbr.rel (%p400) target = $region56
      $region55: #{tpu_custom_call.1} parent=5 // pred_region
        %s403 = ssub.s32 %s32, 2
        // Predicated region
        $region57: #{tpu_custom_call.1} parent=55 // pred_check
          %p404 = pneg %p144
        $region58: #{tpu_custom_call.1} parent=55 // pred_check_branch
          %406 = sbr.rel (%p404) target = $region60
        $region59: #{tpu_custom_call.1} parent=55 // pred_region
          %s407 = sand.u32 %s129, 1
          %s408 = scalar_lea.sflag [#allocation9], %s407
          %s409 = sand.u32 %s129, 1
          %s410 = smul.addr %s409, 8
          %s411 = scalar_lea.vmem [#allocation12], %s410
          %412 = dma.done %s408, 128
        $region60: #{tpu_custom_call.1} parent=55 // pred_fallthru
          _
      $region56: #{tpu_custom_call.1} parent=5 // pred_fallthru
        _
    $region6: #{tpu_custom_call.1} parent=1 // loop_footer
      %s36 = sadd.s32 1, %s32
    $region7: #{tpu_custom_call.1} parent=1 // loop_footer_branch
      %31 = sbr.rel target = $region3
    $region8: #{tpu_custom_call.1} parent=1 // loop_exit
      _
    %413 = vsyncpa [#allocation8], 1
    %s414 = scalar_lea.sflag [#allocation8], 1
    %415 = vsyncpa %s414, 1
    %416 = vsyncpa [#allocation11], 1
    %s417 = scalar_lea.sflag [#allocation11], 1
    %418 = vsyncpa %s417, 1
    %419 = vsyncpa [#allocation9], 1
    %s420 = scalar_lea.sflag [#allocation9], 1
    %421 = vsyncpa %s420, 1

</llo_original>
